<compile_context>
chip_gen: v7x
topology: tpu7x:2x2x1
jax: 0.10.0
libtpu: 0.0.40
codegen_flags: <defaults>
</compile_context>

<pallas_src>
import math

import jax
import jax.numpy as jnp
from jax import lax
from jax.experimental import pallas as pl
from jax.experimental.pallas import tpu as pltpu


# ---------------------------------------------------------------------------
# Kernels
# ---------------------------------------------------------------------------

def _make_sum_kernel(S, tile_s, tiles_per_chunk, needs_mask):
    """Per-row (= per (batch, channel)) partial sums over the spatial axis."""

    def _sum_kernel(x_ref, acc_ref):
        # x_ref:   (TILE_R, TILE_S)   rows = flattened (n, c), cols = spatial
        # acc_ref: (1, TILE_R, 1)     f32 accumulator, resident across s axis
        @pl.when(pl.program_id(2) == 0)
        def _():
            acc_ref[...] = jnp.zeros_like(acc_ref)

        x = x_ref[...]
        if needs_mask:
            # Static-shape lane mask against the TRUE spatial extent S.  It
            # also zeroes fully out-of-range (overrun) tiles of the chunked
            # reduction grid, so garbage lanes never reach the accumulator.
            g = pl.program_id(1) * tiles_per_chunk + pl.program_id(2)
            start = g * tile_s
            col = lax.broadcasted_iota(jnp.int32, x.shape, 1)
            x = jnp.where(col < (S - start), x, jnp.zeros_like(x))

        acc_ref[...] += jnp.sum(x, axis=-1, keepdims=True,
                                dtype=jnp.float32)[None]

    return _sum_kernel


def _apply_kernel(x_ref, g_ref, o_ref):
    # x_ref: (TILE_R, TILE_S), g_ref: (TILE_R, 1) gate in x's dtype.
    # Out-of-bounds lanes/rows of partial blocks are read as garbage but the
    # corresponding writes are dropped by Pallas, so no masking is needed.
    o_ref[...] = x_ref[...] * g_ref[...]


# ---------------------------------------------------------------------------
# Tile / VMEM sizing
# ---------------------------------------------------------------------------

def _vmem_budget():
    """(total block budget, scoped-VMEM limit) per TPU generation."""
    try:
        phys = pltpu.get_tpu_info().vmem_capacity_bytes
    except Exception:
        phys = 64 * 1024 * 1024            # v7x-safe fallback (64 MiB / TC)
    budget = min(phys // 2, 40 * 1024 * 1024)   # v7x: 32 MiB, v5e/v6e: 40 MiB
    limit = budget + 16 * 1024 * 1024           # headroom for Mosaic scratch
    return budget, limit


def _choose_tiles(R, S, itemsize, n_bufs, budget_bytes,
                  tile_s_cap=None, tile_r_cap=None):
    """Pick (TILE_R, TILE_S) so n_bufs pipelined buffers fit the budget."""
    per_buf = max(budget_bytes // n_bufs, 8 * 128 * itemsize)
    s_ceil = -(-S // 128) * 128

    tile_r = min(R, 8)
    tile_s = max(128, (per_buf // (tile_r * itemsize) // 128) * 128)
    tile_s = min(tile_s, s_ceil)
    if tile_s_cap is not None:             # test knob only
        tile_s = min(tile_s, max(128, (tile_s_cap // 128) * 128))

    # If one spatial tile already covers S, spend the leftover budget on rows.
    if tile_s >= s_ceil and R > tile_r:
        tr = (per_buf // (tile_s * itemsize) // 8) * 8
        tile_r = min(R, max(8, tr))
    if tile_r_cap is not None:             # test knob only
        tile_r = min(tile_r, max(1, tile_r_cap))

    # (8, 128) rule: the row tile must be sublane-aligned unless it spans the
    # whole row axis; the spatial tile is always a multiple of 128.
    if tile_r < R:
        tile_r = max(min(R, 8), (tile_r // 8) * 8)
    return tile_r, tile_s


# ---------------------------------------------------------------------------
# Forward pass
# ---------------------------------------------------------------------------

def eca_forward(x, conv_w, k, *, tile_s_cap=None, tile_r_cap=None):
    """x: (N, C, D, H, W); conv_w: (k,) Conv1d(1, 1, k, bias=False) weights."""
    N, C, D, H, W = x.shape
    S = D * H * W
    R = N * C
    itemsize = jnp.dtype(x.dtype).itemsize
    budget, vmem_limit = _vmem_budget()

    x2 = x.reshape(R, S)   # rows = (n, c) pairs -> sublane-dense for any C

    # ---- pass 1: per-row sums over the spatial axis -------------------------
    # Only the input is double-buffered (the accumulator block is tiny), so
    # pass 1 gets ~2x larger spatial tiles than pass 2 at the same budget.
    tr1, ts1 = _choose_tiles(R, S, itemsize, 2, budget, tile_s_cap, tile_r_cap)
    r_tiles1 = -(-R // tr1)
    n_s_tiles = -(-S // ts1)
    # Split the reduction into 2 parallel chunks when there is no row-level
    # parallelism, so both TensorCores on v7x participate at small batch.
    n_chunks = 2 if (r_tiles1 == 1 and n_s_tiles >= 2) else 1
    tiles_per_chunk = -(-n_s_tiles // n_chunks)
    needs_mask = (S % ts1 != 0) or (n_chunks * tiles_per_chunk != n_s_tiles)

    def _sum_in_map(r, c, s):
        # Clamp overrun steps of the chunked grid onto the last valid tile;
        # the in-kernel mask zeroes their contribution.
        return (r, jnp.minimum(c * tiles_per_chunk + s, n_s_tiles - 1))

    part_sums = pl.pallas_call(
        _make_sum_kernel(S, ts1, tiles_per_chunk, needs_mask),
        out_shape=jax.ShapeDtypeStruct((n_chunks, R, 1), jnp.float32),
        grid=(r_tiles1, n_chunks, tiles_per_chunk),
        in_specs=[pl.BlockSpec((tr1, ts1), _sum_in_map)],
        out_specs=pl.BlockSpec((1, tr1, 1), lambda r, c, s: (c, r, 0)),
        compiler_params=pltpu.CompilerParams(
            dimension_semantics=("parallel", "parallel", "arbitrary"),
            vmem_limit_bytes=vmem_limit),
        cost_estimate=pl.CostEstimate(
            flops=R * S, transcendentals=0,
            bytes_accessed=R * S * itemsize + n_chunks * R * 4),
    )(x2)
    sums = jnp.sum(part_sums[:, :, 0], axis=0)            # (R,)

    # ---- tiny k-tap conv along channels + sigmoid (O(N*C*k), plain JAX) -----
    means = sums.reshape(N, C) * (1.0 / S)                 # TRUE spatial size
    pad = k // 2
    mp = jnp.pad(means, ((0, 0), (pad, pad)))
    y = jnp.zeros_like(means)
    for t in range(k):
        y = y + conv_w[t] * mp[:, t:t + C]
    gate = jax.nn.sigmoid(y).astype(x.dtype).reshape(R, 1)

    # ---- pass 2: tiled broadcast multiply, out_shape is the TRUE (R, S) -----
    tr2, ts2 = _choose_tiles(R, S, itemsize, 4, budget, tile_s_cap, tile_r_cap)
    r_tiles2 = -(-R // tr2)
    s_tiles2 = -(-S // ts2)

    # Note: callers that can donate x could additionally pass
    # input_output_aliases={0: 0} here to reuse x's HBM buffer for the output.
    out = pl.pallas_call(
        _apply_kernel,
        out_shape=jax.ShapeDtypeStruct((R, S), x.dtype),
        grid=(r_tiles2, s_tiles2),
        in_specs=[pl.BlockSpec((tr2, ts2), lambda r, s: (r, s)),
                  pl.BlockSpec((tr2, 1), lambda r, s: (r, 0))],
        out_specs=pl.BlockSpec((tr2, ts2), lambda r, s: (r, s)),
        compiler_params=pltpu.CompilerParams(
            dimension_semantics=("parallel", "parallel"),
            vmem_limit_bytes=vmem_limit),
        cost_estimate=pl.CostEstimate(
            flops=R * S, transcendentals=0,
            bytes_accessed=2 * R * S * itemsize + R * itemsize),
    )(x2, gate)

    return out.reshape(N, C, D, H, W)


# ---------------------------------------------------------------------------
# Reference & self-test
# ---------------------------------------------------------------------------

def eca_reference(x, conv_w, k):
    """Pure-JAX reference matching the PyTorch module."""
    C = x.shape[1]
    m = jnp.mean(x, axis=(2, 3, 4))                        # (N, C)
    pad = k // 2
    mp = jnp.pad(m, ((0, 0), (pad, pad)))
    y = jnp.zeros_like(m)
    for t in range(k):
        y = y + conv_w[t] * mp[:, t:t + C]
    gate = jax.nn.sigmoid(y)
    return x * gate[:, :, None, None, None]


if __name__ == "__main__":
    def run_case(N, C, D, H, W, tile_s_cap=None, tile_r_cap=None):
        gamma, b = 2, 1
        k = int(abs(math.log2(C) / gamma + b))
        k = k if k % 2 else k + 1                          # C=4 -> k=3
        key = jax.random.PRNGKey(0)
        kx, kw = jax.random.split(key)
        x = jax.random.normal(kx, (N, C, D, H, W), dtype=jnp.float32)
        bound = 1.0 / math.sqrt(k)
        conv_w = jax.random.uniform(kw, (k,), minval=-bound, maxval=bound,
                                    dtype=jnp.float32)
        out = jax.block_until_ready(
            eca_forward(x, conv_w, k,
                        tile_s_cap=tile_s_cap, tile_r_cap=tile_r_cap))
        ref = eca_reference(x, conv_w, k)
        assert out.shape == x.shape
        assert jnp.allclose(out, ref, atol=1e-5, rtol=1e-5), \
            f"mismatch vs reference for shape {(N, C, D, H, W)}"

    # S a multiple of 128, single tile, no masking.
    run_case(2, 4, 4, 8, 8)
    # Ragged S (no pad / no slice path), single tile + lane mask.
    run_case(2, 4, 3, 5, 7)
    # Multiple spatial tiles + 2-way chunked reduction with an overrun tile.
    run_case(1, 8, 3, 7, 13, tile_s_cap=128)
    # Multiple row tiles including a partial last row tile.
    run_case(3, 4, 3, 5, 7, tile_s_cap=128, tile_r_cap=8)
    print("KERNEL_OK")
</pallas_src>

<mosaic_0001>
module attributes {stable_mosaic.version = 11 : i64} {
  func.func @_sum_kernel(%arg0: i32, %arg1: i32, %arg2: i32, %arg3: memref<8x256xf32, #tpu.memory_space<vmem>>, %arg4: memref<1x8x1xf32, #tpu.memory_space<vmem>>) attributes {dimension_semantics = [#tpu.dimension_semantics<parallel>, #tpu.dimension_semantics<parallel>, #tpu.dimension_semantics<arbitrary>], iteration_bounds = array<i64: 1, 1, 1>, scalar_prefetch = 0 : i64, scratch_operands = 0 : i64, tpu.core_type = #tpu.core_type<tc>, window_params = [{transform_indices = @transform_0, window_bounds = array<i64: 8, 256>}, {transform_indices = @transform_1, window_bounds = array<i64: 1, 8, 1>}]} {
    %c0_i32 = arith.constant 0 : i32
    %0 = arith.cmpi eq, %arg2, %c0_i32 : i32
    %1 = arith.extui %0 : i1 to i32
    %c0_i32_0 = arith.constant 0 : i32
    %2 = arith.cmpi ne, %1, %c0_i32_0 : i32
    scf.if %2 {
      %cst_8 = arith.constant 0.000000e+00 : f32
      %10 = vector.broadcast %cst_8 : f32 to vector<1x8x1xf32>
      %c0_9 = arith.constant 0 : index
      %c0_10 = arith.constant 0 : index
      %c0_11 = arith.constant 0 : index
      %11 = vector.load %arg4[%c0_9, %c0_10, %c0_11] : memref<1x8x1xf32, #tpu.memory_space<vmem>>, vector<1x8x1xf32>
      tpu.vector_store %arg4[%c0_9, %c0_10, %c0_11], %10 {strides = array<i32>} : memref<1x8x1xf32, #tpu.memory_space<vmem>>, vector<1x8x1xf32>,
    } else {
    }
    %c0 = arith.constant 0 : index
    %c0_1 = arith.constant 0 : index
    %3 = vector.load %arg3[%c0, %c0_1] : memref<8x256xf32, #tpu.memory_space<vmem>>, vector<8x256xf32>
    %c0_2 = arith.constant 0 : index
    %c0_3 = arith.constant 0 : index
    %c0_4 = arith.constant 0 : index
    %4 = vector.load %arg4[%c0_2, %c0_3, %c0_4] : memref<1x8x1xf32, #tpu.memory_space<vmem>>, vector<1x8x1xf32>
    %cst = arith.constant dense<0.000000e+00> : vector<8xf32>
    %5 = vector.multi_reduction <add>, %3, %cst [1] : vector<8x256xf32> to vector<8xf32>
    %6 = vector.shape_cast %5 : vector<8xf32> to vector<8x1xf32>
    %7 = vector.shape_cast %6 : vector<8x1xf32> to vector<1x8x1xf32>
    %8 = arith.addf %4, %7 : vector<1x8x1xf32>
    %c0_5 = arith.constant 0 : index
    %c0_6 = arith.constant 0 : index
    %c0_7 = arith.constant 0 : index
    %9 = vector.load %arg4[%c0_5, %c0_6, %c0_7] : memref<1x8x1xf32, #tpu.memory_space<vmem>>, vector<1x8x1xf32>
    tpu.vector_store %arg4[%c0_5, %c0_6, %c0_7], %8 {strides = array<i32>} : memref<1x8x1xf32, #tpu.memory_space<vmem>>, vector<1x8x1xf32>,
    return
  }
  func.func @transform_0(%arg0: i32, %arg1: i32, %arg2: i32) -> (i32, i32) {
    %c1_i32 = arith.constant 1 : i32
    %0 = arith.muli %arg1, %c1_i32 : i32
    %1 = arith.addi %0, %arg2 : i32
    %c0_i32 = arith.constant 0 : i32
    %2 = arith.minsi %1, %c0_i32 : i32
    %c0_i32_0 = arith.constant 0 : i32
    return %arg0, %2 : i32, i32
  }
  func.func @transform_1(%arg0: i32, %arg1: i32, %arg2: i32) -> (i32, i32, i32) {
    %c0_i32 = arith.constant 0 : i32
    %c0_i32_0 = arith.constant 0 : i32
    return %arg1, %arg0, %c0_i32 : i32, i32, i32
  }
}

</mosaic_0001>

<llo_original>
// kernel: tpu_custom_call.1
$region0: #{tpu_custom_call.1}
  #allocation0 [shape = 'u32[]', space=smem, size = 0x4, offset = 0x4, fixed_abs, tag = 'smem constant byte address 0x4 - core index']
  #allocation1 [shape = 'u32[144,128]{1,0:T(1,128)}', space=vmem, size = 0x12000, scoped, tag = 'internal scratch']
  %s0 = inlined_call_operand.hbm [shape: f32[8,256], index: 0, kind: input, shape index: {}]
  %s1 = inlined_call_operand.vmem [shape: f32[1,8,1], index: 1, kind: output, shape index: {}]
  %s2 = sld [smem:[#allocation0]]
  $region22: #{tpu_custom_call.1} parent=0
    _
  %s4 = ssub.s32 1, %s2
  %s5 = scalar_select 0, %s4, %s2
  $region1: #{tpu_custom_call.1} parent=0
    #allocation2 [shape = 'u8[8192]{0}', space=vmem, size = 0x2000, scoped, tag = 'input window, operand 0, single buffered']
    #allocation3 [shape = 's32[1]{0}', space=sflag, size = 0x4, scoped, tag = 'scoped memory for tpu_custom_call.1']
    %6 = vsyncpa [#allocation3], 0
    // Predicated region
    $region2: #{tpu_custom_call.1} parent=1 // pred_check
      _
    $region3: #{tpu_custom_call.1} parent=1 // pred_check_branch
      %8 = sbr.rel (0) target = $region5
    $region4: #{tpu_custom_call.1} parent=1 // pred_region
      %s9 = sadd.s32 0, 0
      %p10 = scmp.lt.s32.totalorder %s9, 0
      %s11 = scalar_select %p10, %s9, 0
      %s12 = smul.u32 2, %s11
      %s14 = ssub.s32 256, 256
      %15 = vsyncadd [#allocation3], %s14
      %s16 = smul.addr %s12, 128
      %s17 = scalar_lea.hbm %s0, %s16
      %s19 = sshll.u32 [#allocation2], 4
      %s20 = int_to_ptr.vmem [resolvable:$true] %s19
      %22 = dma.hbm_to_vmem [thread:$0]  %s17, 256, %s20, [#allocation3]
    $region5: #{tpu_custom_call.1} parent=1 // pred_fallthru
      _
    // Predicated region
    $region6: #{tpu_custom_call.1} parent=1 // pred_check
      _
    $region7: #{tpu_custom_call.1} parent=1 // pred_check_branch
      %24 = sbr.rel (0) target = $region9
    $region8: #{tpu_custom_call.1} parent=1 // pred_region
      %25 = dma.done [#allocation3], 256
    $region9: #{tpu_custom_call.1} parent=1 // pred_fallthru
      _
    %s26 = sadd.s32 0, 0
    %p27 = scmp.lt.s32.totalorder %s26, 0
    %s28 = scalar_select %p27, %s26, 0
    %s29 = smul.u32 2, %s28
    %p30 = scmp.eq.s32.totalorder 0, 0
    // Predicated region
    $region10: #{tpu_custom_call.1} parent=1 // pred_check
      %p31 = pneg %p30
    $region11: #{tpu_custom_call.1} parent=1 // pred_check_branch
      %33 = sbr.rel (%p31) target = $region13
    $region12: #{tpu_custom_call.1} parent=1 // pred_region
      %vm34 = vcmask 7168
      %35 = vst.msk [vmem:[%s1] sm:$0xff] %vm34, 0.0
    $region13: #{tpu_custom_call.1} parent=1 // pred_fallthru
      _
    %v36 = vld [vmem:[#allocation2] sm:$0xff]
    %v37 = vld [vmem:[#allocation2 + $0x8] sm:$0xff]
    %v38 = vld [vmem:[%s1] sm:$0xff]
    %v39 = vadd.f32 %v36, %v37
    %40 = vadd.xlane.f32.xlu0 %v39
    %v41 = vpop.xlane.xlu0 %40
    %v42 = vadd.f32 %v38, %v41
    %vm43 = vcmask 7168
    %44 = vst.msk [vmem:[%s1] sm:$0xff] %vm43, %v42
    // Predicated region
    $region14: #{tpu_custom_call.1} parent=1 // pred_check
      _
    $region15: #{tpu_custom_call.1} parent=1 // pred_check_branch
      %46 = sbr.rel (0) target = $region17
    $region16: #{tpu_custom_call.1} parent=1 // pred_region
      _
    $region17: #{tpu_custom_call.1} parent=1 // pred_fallthru
      _
    // Predicated region
    $region18: #{tpu_custom_call.1} parent=1 // pred_check
      _
    $region19: #{tpu_custom_call.1} parent=1 // pred_check_branch
      %48 = sbr.rel (0) target = $region21
    $region20: #{tpu_custom_call.1} parent=1 // pred_region
      _
    $region21: #{tpu_custom_call.1} parent=1 // pred_fallthru
      _
    %49 = vsyncpa [#allocation3], 1

</llo_original>
